<compile_context>
chip_gen: v6e
topology: v6e:2x2x1
jax: 0.10.0
libtpu: 0.0.40
codegen_flags: <defaults>
</compile_context>

<pallas_src>
import jax
import jax.numpy as jnp
from jax.experimental import pallas as pl
from jax.experimental.pallas import tpu as pltpu


def _round_up(x, m):
    return (x + m - 1) // m * m


# ----------------------------------------------------------------------------
# Parameter packing (done once, outside any timestep loop).
# ----------------------------------------------------------------------------
def prepare_params(weight_ih, weight_hh, bias_ih, bias_hh, matmul_dtype=None):
    """Pack PyTorch-layout parameters for the Pallas kernels.

    weight_ih : [3H, I], weight_hh : [3H, H], bias_* : [3H]   (PyTorch layout)
    matmul_dtype : optional dtype (e.g. jnp.bfloat16) for the x / W_ih
                   projection path only; W_hh and the carried state stay f32.

    Returns (w_ih_p [I, 3*Hp], w_hh_p [H, 3*Hp], b_p [1, 3*Hp]) where
    Hp == H when 3H <= 128 or H % 128 == 0 (compact packing), else
    Hp == round_up(H, 128) so each gate block starts on a lane boundary.
    """
    three_h = weight_ih.shape[0]
    H = weight_hh.shape[1]
    assert three_h == 3 * H
    Hp = H if (3 * H <= 128 or H % 128 == 0) else _round_up(H, 128)
    pad = Hp - H

    w_ih = weight_ih.T.astype(jnp.float32)            # [I, 3H]
    w_hh = weight_hh.T.astype(jnp.float32)            # [H, 3H]
    b = (bias_ih + bias_hh).reshape(1, 3 * H).astype(jnp.float32)

    def pack(m):
        blocks = [jnp.pad(m[:, g * H:(g + 1) * H], ((0, 0), (0, pad)))
                  for g in range(3)]
        return jnp.concatenate(blocks, axis=1)         # [., 3*Hp]

    w_ih_p, w_hh_p, b_p = pack(w_ih), pack(w_hh), pack(b)
    if matmul_dtype is not None:
        w_ih_p = w_ih_p.astype(matmul_dtype)           # x-projection path only
    return w_ih_p, w_hh_p, b_p


# ----------------------------------------------------------------------------
# Single-step kernel (exactly the PyTorch module's forward).
# ----------------------------------------------------------------------------
def _step_kernel(x_ref, hx_ref, cx_ref, wih_ref, whh_ref, b_ref, out_ref):
    H = cx_ref.shape[-1]
    Hp = whh_ref.shape[-1] // 3

    gates = (
        jnp.dot(x_ref[...].astype(wih_ref.dtype), wih_ref[...],
                preferred_element_type=jnp.float32)
        + jnp.dot(hx_ref[...], whh_ref[...], preferred_element_type=jnp.float32)
        + b_ref[...]
    )

    ingate = jax.nn.sigmoid(gates[:, 0:H])
    cellgate = jnp.tanh(gates[:, Hp:Hp + H])
    outgate = jax.nn.sigmoid(gates[:, 2 * Hp:2 * Hp + H])
    forgetgate = 1.0 - ingate                    # coupled forget gate

    cy = forgetgate * cx_ref[...].astype(jnp.float32) + ingate * cellgate
    hy = outgate * jnp.tanh(cy)

    # Single lane-dense [B, 2H] store instead of two masked partial stores.
    out_ref[...] = jnp.concatenate([hy, cy], axis=-1).astype(out_ref.dtype)


def coupled_lstm_cell(x, state, params):
    """Pallas CoupledLSTMCell.forward.  Returns (hy, (hy, cy))."""
    w_ih_p, w_hh_p, b_p = params
    hx, cx = state
    B = x.shape[0]
    H = hx.shape[-1]

    vmem = pl.BlockSpec(memory_space=pltpu.VMEM)
    out = pl.pallas_call(
        _step_kernel,
        out_shape=jax.ShapeDtypeStruct((B, 2 * H), x.dtype),
        in_specs=[vmem] * 6,
        out_specs=vmem,
    )(x, hx, cx, w_ih_p, w_hh_p, b_p)

    hy, cy = out[:, :H], out[:, H:]
    return hy, (hy, cy)


# ----------------------------------------------------------------------------
# Sequence kernel: time loop inside the kernel, W_hh resident, state in VMEM.
# ----------------------------------------------------------------------------
def _seq_kernel(xg_ref, whh_ref, h0_ref, c0_ref, out_ref, h_scr, c_scr):
    H = h0_ref.shape[-1]
    Hp = whh_ref.shape[-1] // 3
    t = pl.program_id(0)

    @pl.when(t == 0)
    def _():
        h_scr[...] = h0_ref[...].astype(jnp.float32)
        c_scr[...] = c0_ref[...].astype(jnp.float32)

    # Precomputed x-gates (bias already folded in) + recurrent projection.
    gates = xg_ref[0] + jnp.dot(h_scr[...], whh_ref[...],
                                preferred_element_type=jnp.float32)

    ingate = jax.nn.sigmoid(gates[:, 0:H])
    cellgate = jnp.tanh(gates[:, Hp:Hp + H])
    outgate = jax.nn.sigmoid(gates[:, 2 * Hp:2 * Hp + H])

    cy = (1.0 - ingate) * c_scr[...] + ingate * cellgate
    hy = outgate * jnp.tanh(cy)

    h_scr[...] = hy
    c_scr[...] = cy
    out_ref[0] = jnp.concatenate([hy, cy], axis=-1).astype(out_ref.dtype)


def coupled_lstm_sequence(x_seq, state, params):
    """Apply the cell over a [T, B, I] sequence in ONE pallas_call.

    Returns (hy_seq [T, B, H], (h_T, c_T)).
    """
    w_ih_p, w_hh_p, b_p = params
    h0, c0 = state
    T, B, I = x_seq.shape
    H = h0.shape[-1]
    G = w_hh_p.shape[-1]                                   # 3 * Hp

    # Bulk input projection: one MXU-efficient [T*B, I] @ [I, G] matmul,
    # bias folded in, computed once outside the recurrence.
    xg = (jnp.dot(x_seq.reshape(T * B, I).astype(w_ih_p.dtype), w_ih_p,
                  preferred_element_type=jnp.float32) + b_p).reshape(T, B, G)

    out = pl.pallas_call(
        _seq_kernel,
        grid=(T,),
        out_shape=jax.ShapeDtypeStruct((T, B, 2 * H), x_seq.dtype),
        in_specs=[
            pl.BlockSpec((1, B, G), lambda t: (t, 0, 0)),   # per-step x-gates
            pl.BlockSpec((H, G), lambda t: (0, 0)),         # W_hh, VMEM-resident
            pl.BlockSpec((B, H), lambda t: (0, 0)),         # h0
            pl.BlockSpec((B, H), lambda t: (0, 0)),         # c0
        ],
        out_specs=pl.BlockSpec((1, B, 2 * H), lambda t: (t, 0, 0)),
        scratch_shapes=[pltpu.VMEM((B, H), jnp.float32),    # carried hy
                        pltpu.VMEM((B, H), jnp.float32)],   # carried cy
        compiler_params=pltpu.CompilerParams(
            dimension_semantics=("arbitrary",)),
    )(xg, w_hh_p, h0, c0)

    hy_seq = out[..., :H]
    h_last = out[-1, :, :H]
    c_last = out[-1, :, H:]
    return hy_seq, (h_last, c_last)


# ----------------------------------------------------------------------------
# Pure-JAX reference (mirrors the PyTorch module).
# ----------------------------------------------------------------------------
def _reference_step(x, hx, cx, weight_ih, weight_hh, bias_ih, bias_hh):
    gates = x @ weight_ih.T + bias_ih + hx @ weight_hh.T + bias_hh
    H = hx.shape[-1]
    ingate = jax.nn.sigmoid(gates[:, 0:H])
    forgetgate = 1.0 - ingate
    cellgate = jnp.tanh(gates[:, H:2 * H])
    outgate = jax.nn.sigmoid(gates[:, 2 * H:3 * H])
    cy = forgetgate * cx + ingate * cellgate
    hy = outgate * jnp.tanh(cy)
    return hy, cy


if __name__ == "__main__":
    batch = 8
    input_size = 16
    hidden_size = 32
    seq_len = 8

    key = jax.random.PRNGKey(0)
    kx, ks, kh, kc, kwi, kwh, kbi, kbh = jax.random.split(key, 8)

    x = jax.random.normal(kx, (batch, input_size), dtype=jnp.float32)
    x_seq = jax.random.normal(ks, (seq_len, batch, input_size), dtype=jnp.float32)
    hx = jax.random.normal(kh, (batch, hidden_size), dtype=jnp.float32)
    cx = jax.random.normal(kc, (batch, hidden_size), dtype=jnp.float32)

    weight_ih = jax.random.normal(kwi, (3 * hidden_size, input_size), dtype=jnp.float32)
    weight_hh = jax.random.normal(kwh, (3 * hidden_size, hidden_size), dtype=jnp.float32)
    bias_ih = jax.random.normal(kbi, (3 * hidden_size,), dtype=jnp.float32)
    bias_hh = jax.random.normal(kbh, (3 * hidden_size,), dtype=jnp.float32)

    # Parameter packing happens ONCE.
    params = prepare_params(weight_ih, weight_hh, bias_ih, bias_hh)

    # --- single-step (exact module semantics) --------------------------------
    step = jax.jit(coupled_lstm_cell)
    hy, (hy2, cy) = step(x, (hx, cx), params)
    jax.block_until_ready((hy, hy2, cy))

    hy_ref, cy_ref = _reference_step(x, hx, cx, weight_ih, weight_hh, bias_ih, bias_hh)
    assert jnp.allclose(hy, hy_ref, atol=1e-5, rtol=1e-5)
    assert jnp.allclose(hy2, hy_ref, atol=1e-5, rtol=1e-5)
    assert jnp.allclose(cy, cy_ref, atol=1e-5, rtol=1e-5)

    # --- sequence mode (time loop inside the kernel) --------------------------
    seq = jax.jit(coupled_lstm_sequence)
    hy_seq, (h_last, c_last) = seq(x_seq, (hx, cx), params)
    jax.block_until_ready((hy_seq, h_last, c_last))

    h_r, c_r = hx, cx
    hy_seq_ref = []
    for t in range(seq_len):
        h_r, c_r = _reference_step(x_seq[t], h_r, c_r,
                                   weight_ih, weight_hh, bias_ih, bias_hh)
        hy_seq_ref.append(h_r)
    hy_seq_ref = jnp.stack(hy_seq_ref, axis=0)

    assert jnp.allclose(hy_seq, hy_seq_ref, atol=1e-4, rtol=1e-4)
    assert jnp.allclose(h_last, h_r, atol=1e-4, rtol=1e-4)
    assert jnp.allclose(c_last, c_r, atol=1e-4, rtol=1e-4)

    print("KERNEL_OK")
</pallas_src>

<mosaic_0001>
module attributes {stable_mosaic.version = 11 : i64} {
  func.func @_step_kernel(%arg0: memref<8x16xf32, #tpu.memory_space<vmem>>, %arg1: memref<8x32xf32, #tpu.memory_space<vmem>>, %arg2: memref<8x32xf32, #tpu.memory_space<vmem>>, %arg3: memref<16x96xf32, #tpu.memory_space<vmem>>, %arg4: memref<32x96xf32, #tpu.memory_space<vmem>>, %arg5: memref<1x96xf32, #tpu.memory_space<vmem>>, %arg6: memref<8x64xf32, #tpu.memory_space<vmem>>) attributes {dimension_semantics = [], scalar_prefetch = 0 : i64, scratch_operands = 0 : i64, tpu.core_type = #tpu.core_type<tc>} {
    %c0 = arith.constant 0 : index
    %c0_0 = arith.constant 0 : index
    %0 = vector.load %arg0[%c0, %c0_0] : memref<8x16xf32, #tpu.memory_space<vmem>>, vector<8x16xf32>
    %c0_1 = arith.constant 0 : index
    %c0_2 = arith.constant 0 : index
    %1 = vector.load %arg3[%c0_1, %c0_2] : memref<16x96xf32, #tpu.memory_space<vmem>>, vector<16x96xf32>
    %cst = arith.constant dense<0.000000e+00> : vector<8x96xf32>
    %2 = tpu.matmul %0, %1, %cst {dimension_numbers = #tpu.dot_dimension_numbers<[1], [0], [0], [1], [0, 0, 1, 1], [], []>} : vector<8x16xf32>, vector<16x96xf32>, vector<8x96xf32> -> vector<8x96xf32>
    %c0_3 = arith.constant 0 : index
    %c0_4 = arith.constant 0 : index
    %3 = vector.load %arg1[%c0_3, %c0_4] : memref<8x32xf32, #tpu.memory_space<vmem>>, vector<8x32xf32>
    %c0_5 = arith.constant 0 : index
    %c0_6 = arith.constant 0 : index
    %4 = vector.load %arg4[%c0_5, %c0_6] : memref<32x96xf32, #tpu.memory_space<vmem>>, vector<32x96xf32>
    %cst_7 = arith.constant dense<0.000000e+00> : vector<8x96xf32>
    %5 = tpu.matmul %3, %4, %cst_7 {dimension_numbers = #tpu.dot_dimension_numbers<[1], [0], [0], [1], [0, 0, 1, 1], [], []>} : vector<8x32xf32>, vector<32x96xf32>, vector<8x96xf32> -> vector<8x96xf32>
    %6 = arith.addf %2, %5 : vector<8x96xf32>
    %c0_8 = arith.constant 0 : index
    %c0_9 = arith.constant 0 : index
    %7 = vector.load %arg5[%c0_8, %c0_9] : memref<1x96xf32, #tpu.memory_space<vmem>>, vector<1x96xf32>
    %8 = vector.broadcast %7 : vector<1x96xf32> to vector<8x96xf32>
    %9 = arith.addf %6, %8 : vector<8x96xf32>
    %10 = vector.extract_strided_slice %9 {offsets = [0, 0], sizes = [8, 32], strides = [1, 1]} : vector<8x96xf32> to vector<8x32xf32>
    %11 = arith.negf %10 : vector<8x32xf32>
    %12 = math.exp %11 : vector<8x32xf32>
    %cst_10 = arith.constant 1.000000e+00 : f32
    %13 = vector.broadcast %cst_10 : f32 to vector<8x32xf32>
    %14 = arith.addf %13, %12 : vector<8x32xf32>
    %15 = arith.divf %13, %14 : vector<8x32xf32>
    %16 = vector.extract_strided_slice %9 {offsets = [0, 32], sizes = [8, 32], strides = [1, 1]} : vector<8x96xf32> to vector<8x32xf32>
    %17 = math.tanh %16 : vector<8x32xf32>
    %18 = vector.extract_strided_slice %9 {offsets = [0, 64], sizes = [8, 32], strides = [1, 1]} : vector<8x96xf32> to vector<8x32xf32>
    %19 = arith.negf %18 : vector<8x32xf32>
    %20 = math.exp %19 : vector<8x32xf32>
    %cst_11 = arith.constant 1.000000e+00 : f32
    %21 = vector.broadcast %cst_11 : f32 to vector<8x32xf32>
    %22 = arith.addf %21, %20 : vector<8x32xf32>
    %23 = arith.divf %21, %22 : vector<8x32xf32>
    %cst_12 = arith.constant 1.000000e+00 : f32
    %24 = vector.broadcast %cst_12 : f32 to vector<8x32xf32>
    %25 = arith.subf %24, %15 : vector<8x32xf32>
    %c0_13 = arith.constant 0 : index
    %c0_14 = arith.constant 0 : index
    %26 = vector.load %arg2[%c0_13, %c0_14] : memref<8x32xf32, #tpu.memory_space<vmem>>, vector<8x32xf32>
    %27 = arith.mulf %25, %26 : vector<8x32xf32>
    %28 = arith.mulf %15, %17 : vector<8x32xf32>
    %29 = arith.addf %27, %28 : vector<8x32xf32>
    %30 = math.tanh %29 : vector<8x32xf32>
    %31 = arith.mulf %23, %30 : vector<8x32xf32>
    %32 = tpu.concatenate %31, %29 in 1 : vector<8x32xf32>, vector<8x32xf32> -> vector<8x64xf32>
    %c0_15 = arith.constant 0 : index
    %c0_16 = arith.constant 0 : index
    %33 = vector.load %arg6[%c0_15, %c0_16] : memref<8x64xf32, #tpu.memory_space<vmem>>, vector<8x64xf32>
    tpu.vector_store %arg6[%c0_15, %c0_16], %32 {strides = array<i32>} : memref<8x64xf32, #tpu.memory_space<vmem>>, vector<8x64xf32>,
    return
  }
}

</mosaic_0001>

<llo_original>
// kernel: coupled_lstm_cell.1
$region0: #{coupled_lstm_cell.1}
  #allocation0 [shape = 'u32[]', space=smem, size = 0x4, offset = 0x4, fixed_abs, tag = 'smem constant byte address 0x4 - core index']
  #allocation1 [shape = 'u32[144,128]{1,0:T(1,128)}', space=vmem, size = 0x12000, scoped, tag = 'internal scratch']
  %s0 = inlined_call_operand.hbm [shape: f32[8,16], index: 0, kind: input, shape index: {}]
  %s1 = inlined_call_operand.hbm [shape: f32[8,32], index: 1, kind: input, shape index: {}]
  %s2 = inlined_call_operand.hbm [shape: f32[8,32], index: 2, kind: input, shape index: {}]
  %s3 = inlined_call_operand.hbm [shape: f32[16,96], index: 3, kind: input, shape index: {}]
  %s4 = inlined_call_operand.hbm [shape: f32[32,96], index: 4, kind: input, shape index: {}]
  %s5 = inlined_call_operand.vmem [shape: f32[1,96], index: 5, kind: input, shape index: {}]
  %s6 = inlined_call_operand.vmem [shape: f32[8,64], index: 6, kind: output, shape index: {}]
  %s7 = sld [smem:[#allocation0]]
  $region54: #{coupled_lstm_cell.1} parent=0
    _
  %s9 = ssub.s32 1, %s7
  %s10 = scalar_select 0, %s9, %s7
  $region1: #{coupled_lstm_cell.1} parent=0
    #allocation2 [shape = 'u8[4096]{0}', space=vmem, size = 0x1000, scoped, tag = 'input window, operand 0, single buffered']
    #allocation3 [shape = 's32[1]{0}', space=sflag, size = 0x4, scoped, tag = 'scoped memory for coupled_lstm_cell.1']
    #allocation4 [shape = 'u8[4096]{0}', space=vmem, size = 0x1000, scoped, tag = 'input window, operand 1, single buffered']
    #allocation5 [shape = 's32[1]{0}', space=sflag, size = 0x4, scoped, tag = 'scoped memory for coupled_lstm_cell.1']
    #allocation6 [shape = 'u8[4096]{0}', space=vmem, size = 0x1000, scoped, tag = 'input window, operand 2, single buffered']
    #allocation7 [shape = 'u8[8192]{0}', space=vmem, size = 0x2000, scoped, tag = 'input window, operand 3, single buffered']
    #allocation8 [shape = 's32[1]{0}', space=sflag, size = 0x4, scoped, tag = 'scoped memory for coupled_lstm_cell.1']
    #allocation9 [shape = 'u8[16384]{0}', space=vmem, size = 0x4000, scoped, tag = 'input window, operand 4, single buffered']
    %11 = vsyncpa [#allocation3], 0
    %12 = vsyncpa [#allocation5], 0
    %13 = vsyncpa [#allocation8], 0
    // Predicated region
    $region2: #{coupled_lstm_cell.1} parent=1 // pred_check
      _
    $region3: #{coupled_lstm_cell.1} parent=1 // pred_check_branch
      %15 = sbr.rel (0) target = $region5
    $region4: #{coupled_lstm_cell.1} parent=1 // pred_region
      %s17 = ssub.s32 128, 128
      %18 = vsyncadd [#allocation3], %s17
      %s20 = sshll.u32 [#allocation2], 4
      %s21 = int_to_ptr.vmem [resolvable:$true] %s20
      %23 = dma.hbm_to_vmem [thread:$0]  %s0, 128, %s21, [#allocation3]
    $region5: #{coupled_lstm_cell.1} parent=1 // pred_fallthru
      _
    // Predicated region
    $region6: #{coupled_lstm_cell.1} parent=1 // pred_check
      _
    $region7: #{coupled_lstm_cell.1} parent=1 // pred_check_branch
      %25 = sbr.rel (0) target = $region9
    $region8: #{coupled_lstm_cell.1} parent=1 // pred_region
      %s27 = ssub.s32 128, 128
      %28 = vsyncadd [#allocation5], %s27
      %s30 = sshll.u32 [#allocation4], 4
      %s31 = int_to_ptr.vmem [resolvable:$true] %s30
      %33 = dma.hbm_to_vmem [thread:$0]  %s1, 128, %s31, [#allocation5]
    $region9: #{coupled_lstm_cell.1} parent=1 // pred_fallthru
      _
    // Predicated region
    $region10: #{coupled_lstm_cell.1} parent=1 // pred_check
      _
    $region11: #{coupled_lstm_cell.1} parent=1 // pred_check_branch
      %35 = sbr.rel (0) target = $region13
    $region12: #{coupled_lstm_cell.1} parent=1 // pred_region
      %s37 = ssub.s32 128, 128
      %38 = vsyncadd [#allocation5], %s37
      %s40 = sshll.u32 [#allocation6], 4
      %s41 = int_to_ptr.vmem [resolvable:$true] %s40
      %43 = dma.hbm_to_vmem [thread:$0]  %s2, 128, %s41, [#allocation5]
    $region13: #{coupled_lstm_cell.1} parent=1 // pred_fallthru
      _
    // Predicated region
    $region14: #{coupled_lstm_cell.1} parent=1 // pred_check
      _
    $region15: #{coupled_lstm_cell.1} parent=1 // pred_check_branch
      %45 = sbr.rel (0) target = $region17
    $region16: #{coupled_lstm_cell.1} parent=1 // pred_region
      %s47 = ssub.s32 256, 256
      %48 = vsyncadd [#allocation8], %s47
      %s49 = sshll.u32 [#allocation7], 4
      %s50 = int_to_ptr.vmem [resolvable:$true] %s49
      %55 = dma.hbm_to_vmem [thread:$0]  %s3, 256, %s50, [#allocation8], 128, 128, 8
    $region17: #{coupled_lstm_cell.1} parent=1 // pred_fallthru
      _
    // Predicated region
    $region18: #{coupled_lstm_cell.1} parent=1 // pred_check
      _
    $region19: #{coupled_lstm_cell.1} parent=1 // pred_check_branch
      %57 = sbr.rel (0) target = $region21
    $region20: #{coupled_lstm_cell.1} parent=1 // pred_region
      %s59 = ssub.s32 512, 512
      %60 = vsyncadd [#allocation8], %s59
      %s61 = sshll.u32 [#allocation9], 4
      %s62 = int_to_ptr.vmem [resolvable:$true] %s61
      %67 = dma.hbm_to_vmem [thread:$0]  %s4, 512, %s62, [#allocation8], 128, 128, 8
    $region21: #{coupled_lstm_cell.1} parent=1 // pred_fallthru
      _
    // Predicated region
    $region22: #{coupled_lstm_cell.1} parent=1 // pred_check
      _
    $region23: #{coupled_lstm_cell.1} parent=1 // pred_check_branch
      %69 = sbr.rel (0) target = $region25
    $region24: #{coupled_lstm_cell.1} parent=1 // pred_region
      _
    $region25: #{coupled_lstm_cell.1} parent=1 // pred_fallthru
      _
    // Predicated region
    $region26: #{coupled_lstm_cell.1} parent=1 // pred_check
      _
    $region27: #{coupled_lstm_cell.1} parent=1 // pred_check_branch
      %71 = sbr.rel (0) target = $region29
    $region28: #{coupled_lstm_cell.1} parent=1 // pred_region
      %72 = dma.done [#allocation3], 128
    $region29: #{coupled_lstm_cell.1} parent=1 // pred_fallthru
      _
    // Predicated region
    $region30: #{coupled_lstm_cell.1} parent=1 // pred_check
      _
    $region31: #{coupled_lstm_cell.1} parent=1 // pred_check_branch
      %74 = sbr.rel (0) target = $region33
    $region32: #{coupled_lstm_cell.1} parent=1 // pred_region
      %75 = dma.done [#allocation5], 128
    $region33: #{coupled_lstm_cell.1} parent=1 // pred_fallthru
      _
    // Predicated region
    $region34: #{coupled_lstm_cell.1} parent=1 // pred_check
      _
    $region35: #{coupled_lstm_cell.1} parent=1 // pred_check_branch
      %77 = sbr.rel (0) target = $region37
    $region36: #{coupled_lstm_cell.1} parent=1 // pred_region
      %78 = dma.done [#allocation5], 128
    $region37: #{coupled_lstm_cell.1} parent=1 // pred_fallthru
      _
    // Predicated region
    $region38: #{coupled_lstm_cell.1} parent=1 // pred_check
      _
    $region39: #{coupled_lstm_cell.1} parent=1 // pred_check_branch
      %80 = sbr.rel (0) target = $region41
    $region40: #{coupled_lstm_cell.1} parent=1 // pred_region
      %81 = dma.done [#allocation8], 256
    $region41: #{coupled_lstm_cell.1} parent=1 // pred_fallthru
      _
    // Predicated region
    $region42: #{coupled_lstm_cell.1} parent=1 // pred_check
      _
    $region43: #{coupled_lstm_cell.1} parent=1 // pred_check_branch
      %83 = sbr.rel (0) target = $region45
    $region44: #{coupled_lstm_cell.1} parent=1 // pred_region
      %84 = dma.done [#allocation8], 512
    $region45: #{coupled_lstm_cell.1} parent=1 // pred_fallthru
      _
    %v85 = vld [vmem:[#allocation2] sm:$0xff]
    %v86 = vld [vmem:[#allocation7] sm:$0xff]
    %v87 = vld [vmem:[#allocation7 + $0x8] sm:$0xff]
    %v88 = vld [vmem:[#allocation4] sm:$0xff]
    %v89 = vld [vmem:[#allocation9] sm:$0xff]
    %v90 = vld [vmem:[#allocation9 + $0x8] sm:$0xff]
    %v91 = vld [vmem:[#allocation9 + $0x10] sm:$0xff]
    %v92 = vld [vmem:[#allocation9 + $0x18] sm:$0xff]
    %vm93 = vcmask 261120
    %v95 = vsel %vm93, %v88, 0
    %97 = vmatprep.subr.mxu0 0.0
    %98 = vmatpush1.msra.mxu0 0.0
    %99 = vmatprep.subr.mxu0 0.0
    %100 = vmatpush1.msra.mxu0 0.0
    %101 = vmatprep.subr.mxu0 0.0
    %102 = vmatpush1.msra.mxu0 0.0
    %103 = vmatprep.subr.mxu0 0.0
    %104 = vmatpush1.msra.mxu0 0.0
    %105 = vmatprep.subr.mxu0 0.0
    %106 = vmatpush1.msra.mxu0 0.0
    %107 = vmatprep.subr.mxu0 0.0
    %108 = vmatpush1.msra.mxu0 0.0
    %109 = vmatprep.subr.mxu0 0.0
    %110 = vmatpush1.msra.mxu0 0.0
    %111 = vmatprep.subr.mxu0 0.0
    %112 = vmatpush1.msra.mxu0 0.0
    %113 = vmatprep.subr.mxu0 0.0
    %114 = vmatpush1.msra.mxu0 0.0
    %115 = vmatprep.subr.mxu0 0.0
    %116 = vmatpush1.msra.mxu0 0.0
    %117 = vmatprep.subr.mxu0 0.0
    %118 = vmatpush1.msra.mxu0 0.0
    %119 = vmatprep.subr.mxu0 0.0
    %120 = vmatpush1.msra.mxu0 0.0
    %121 = vmatprep.subr.mxu0 0.0
    %122 = vmatpush1.msra.mxu0 %v92
    %123 = vmatprep.subr.mxu0 0.0
    %124 = vmatpush1.msra.mxu0 %v91
    %125 = vmatprep.subr.mxu0 0.0
    %126 = vmatpush1.msra.mxu0 %v90
    %127 = vmatprep.subr.mxu0 0.0
    %128 = vmatpush1.msra.mxu0 %v89
    %129 = vmatprep.subr.mxu0 0.0
    %130 = vmatpush2.msra.mxu0 0.0
    %131 = vmatprep.subr.mxu0 0.0
    %132 = vmatpush2.msra.mxu0 0.0
    %133 = vmatprep.subr.mxu0 0.0
    %134 = vmatpush2.msra.mxu0 0.0
    %135 = vmatprep.subr.mxu0 0.0
    %136 = vmatpush2.msra.mxu0 0.0
    %137 = vmatprep.subr.mxu0 0.0
    %138 = vmatpush2.msra.mxu0 0.0
    %139 = vmatprep.subr.mxu0 0.0
    %140 = vmatpush2.msra.mxu0 0.0
    %141 = vmatprep.subr.mxu0 0.0
    %142 = vmatpush2.msra.mxu0 0.0
    %143 = vmatprep.subr.mxu0 0.0
    %144 = vmatpush2.msra.mxu0 0.0
    %145 = vmatprep.subr.mxu0 0.0
    %146 = vmatpush2.msra.mxu0 0.0
    %147 = vmatprep.subr.mxu0 0.0
    %148 = vmatpush2.msra.mxu0 0.0
    %149 = vmatprep.subr.mxu0 0.0
    %150 = vmatpush2.msra.mxu0 0.0
    %151 = vmatprep.subr.mxu0 0.0
    %152 = vmatpush2.msra.mxu0 0.0
    %153 = vmatprep.subr.mxu0 0.0
    %154 = vmatpush2.msra.mxu0 0.0
    %155 = vmatprep.subr.mxu0 0.0
    %156 = vmatpush2.msra.mxu0 0.0
    %157 = vmatprep.subr.mxu0 0.0
    %158 = vmatpush2.msra.mxu0 0.0
    %159 = vmatprep.subr.mxu0 0.0
    %160 = vmatpush2.msra.mxu0 0.0
    %161 = vmatprep.mubr.f32.mxu0 0.0
    %162 = vmatmul.mubr.f32.gmra.mxu0 %v95
    %v163 = vpop.f32.mrf.mxu0
    %v164 = vadd.f32 0.0, %v163
    %v165 = vpop.f32.mrf.mxu0
    %166 = vdwg.mxu0
    %vm167 = vcmask 130048
    %v169 = vsel %vm167, %v85, 0
    %171 = vmatprep.subr.mxu0 0.0
    %172 = vmatpush1.msra.mxu0 0.0
    %173 = vmatprep.subr.mxu0 0.0
    %174 = vmatpush1.msra.mxu0 0.0
    %175 = vmatprep.subr.mxu0 0.0
    %176 = vmatpush1.msra.mxu0 0.0
    %177 = vmatprep.subr.mxu0 0.0
    %178 = vmatpush1.msra.mxu0 0.0
    %179 = vmatprep.subr.mxu0 0.0
    %180 = vmatpush1.msra.mxu0 0.0
    %181 = vmatprep.subr.mxu0 0.0
    %182 = vmatpush1.msra.mxu0 0.0
    %183 = vmatprep.subr.mxu0 0.0
    %184 = vmatpush1.msra.mxu0 0.0
    %185 = vmatprep.subr.mxu0 0.0
    %186 = vmatpush1.msra.mxu0 0.0
    %187 = vmatprep.subr.mxu0 0.0
    %188 = vmatpush1.msra.mxu0 0.0
    %189 = vmatprep.subr.mxu0 0.0
    %190 = vmatpush1.msra.mxu0 0.0
    %191 = vmatprep.subr.mxu0 0.0
    %192 = vmatpush1.msra.mxu0 0.0
    %193 = vmatprep.subr.mxu0 0.0
    %194 = vmatpush1.msra.mxu0 0.0
    %195 = vmatprep.subr.mxu0 0.0
    %196 = vmatpush1.msra.mxu0 0.0
    %197 = vmatprep.subr.mxu0 0.0
    %198 = vmatpush1.msra.mxu0 0.0
    %199 = vmatprep.subr.mxu0 0.0
    %200 = vmatpush1.msra.mxu0 %v87
    %201 = vmatprep.subr.mxu0 0.0
    %202 = vmatpush1.msra.mxu0 %v86
    %203 = vmatprep.subr.mxu0 0.0
    %204 = vmatpush2.msra.mxu0 0.0
    %205 = vmatprep.subr.mxu0 0.0
    %206 = vmatpush2.msra.mxu0 0.0
    %207 = vmatprep.subr.mxu0 0.0
    %208 = vmatpush2.msra.mxu0 0.0
    %209 = vmatprep.subr.mxu0 0.0
    %210 = vmatpush2.msra.mxu0 0.0
    %211 = vmatprep.subr.mxu0 0.0
    %212 = vmatpush2.msra.mxu0 0.0
    %213 = vmatprep.subr.mxu0 0.0
    %214 = vmatpush2.msra.mxu0 0.0
    %215 = vmatprep.subr.mxu0 0.0
    %216 = vmatpush2.msra.mxu0 0.0
    %217 = vmatprep.subr.mxu0 0.0
    %218 = vmatpush2.msra.mxu0 0.0
    %219 = vmatprep.subr.mxu0 0.0
    %220 = vmatpush2.msra.mxu0 0.0
    %221 = vmatprep.subr.mxu0 0.0
    %222 = vmatpush2.msra.mxu0 0.0
    %223 = vmatprep.subr.mxu0 0.0
    %224 = vmatpush2.msra.mxu0 0.0
    %225 = vmatprep.subr.mxu0 0.0
    %226 = vmatpush2.msra.mxu0 0.0
    %227 = vmatprep.subr.mxu0 0.0
    %228 = vmatpush2.msra.mxu0 0.0
    %229 = vmatprep.subr.mxu0 0.0
    %230 = vmatpush2.msra.mxu0 0.0
    %231 = vmatprep.subr.mxu0 0.0
    %232 = vmatpush2.msra.mxu0 0.0
    %233 = vmatprep.subr.mxu0 0.0
    %234 = vmatpush2.msra.mxu0 0.0
    %235 = vmatprep.mubr.f32.mxu0 0.0
    %236 = vmatmul.mubr.f32.gmra.mxu0 %v169
    %v237 = vpop.f32.mrf.mxu0
    %v238 = vadd.f32 %v164, %v237
    %v239 = vpop.f32.mrf.mxu0
    %240 = vdwg.mxu0
    %v241 = vld [vmem:[%s5] sm:$0x1]
    %v243 = vlaneseq
    %v244 = vshrl.u32 %v243, 7
    %v245 = vsub.s32 0, %v244
    %v246 = vrot.slane %v241, %v245
    %v248 = vadd.f32 %v238, %v246
    %v249 = vxor.u32 %v248, 2147483648
    %v250 = vmul.f32 %v249, 1.442695
    %v251 = vpow.pop %v250
    %v252 = vadd.f32 %v251, 1.0
    %v253 = vrcp.pop %v252
    %v254 = vmul.f32 1.0, %v253
    %v255 = vtanh.pop %v248
    %v256 = vsub.f32 1.0, %v254
    %v257 = vld [vmem:[#allocation6] sm:$0xff]
    %v258 = vmul.f32 %v256, %v257
    %260 = vrot.lane.b32.xlu0 %v255, 96
    %v261 = vpop.permute.xlu0 %260
    %v263 = vmul.f32 %v254, %v261
    %v264 = vadd.f32 %v258, %v263
    %v265 = vtanh.pop %v264
    %267 = vrot.lane.b32.xlu0 %v265, 64
    %v268 = vpop.permute.xlu0 %267
    %v270 = vmul.f32 %v254, %v268
    %272 = vrot.lane.b32.xlu0 %v270, 64
    %v273 = vpop.permute.xlu0 %272
    %276 = vrot.lane.b32.xlu0 %v264, 32
    %v277 = vpop.permute.xlu0 %276
    %v279 = vsel %vm93, %v273, %v277
    %vm280 = vcmask 523264
    %281 = vst.msk [vmem:[%s6] sm:$0xff] %vm280, %v279
    // Predicated region
    $region46: #{coupled_lstm_cell.1} parent=1 // pred_check
      _
    $region47: #{coupled_lstm_cell.1} parent=1 // pred_check_branch
      %283 = sbr.rel (0) target = $region49
    $region48: #{coupled_lstm_cell.1} parent=1 // pred_region
      _
    $region49: #{coupled_lstm_cell.1} parent=1 // pred_fallthru
      _
    // Predicated region
    $region50: #{coupled_lstm_cell.1} parent=1 // pred_check
      _
    $region51: #{coupled_lstm_cell.1} parent=1 // pred_check_branch
      %285 = sbr.rel (0) target = $region53
    $region52: #{coupled_lstm_cell.1} parent=1 // pred_region
      _
    $region53: #{coupled_lstm_cell.1} parent=1 // pred_fallthru
      _
    %286 = vsyncpa [#allocation3], 1
    %287 = vsyncpa [#allocation5], 1
    %288 = vsyncpa [#allocation8], 1

</llo_original>
